<compile_context>
chip_gen: v7x
topology: tpu7x:2x2x1
jax: 0.10.0
libtpu: 0.0.40
codegen_flags: <defaults>
</compile_context>

<pallas_src>
import functools

import jax
import jax.numpy as jnp
from jax import lax
from jax.experimental import pallas as pl
from jax.experimental.pallas import tpu as pltpu

BN_EPS = 1e-5


def _round_up(x, m):
    return ((x + m - 1) // m) * m


def _mlp_kernel(x_ref, w1, b1, w2, b2, w3, b3, w4, b4, o_ref):
    """Fused MLP forward for one batch tile. Batch lives on the lane axis.

    Shapes (per tile):
      x_ref : (2, tile_n)        activations, features on sublanes
      w1    : (64, 2)   b1: (64, 1)   (BN + bias pre-folded)
      w2    : (64, 64)  b2: (64, 1)
      w3    : (8, 64)   b3: (8, 1)
      w4    : (8, 1)    b4: (1, 1)
      o_ref : (1, tile_n)
    """
    x = x_ref[...]  # (2, tile_n) f32

    # --- block 1: Linear(2,64)+BN+Tanh as VPU broadcast FMAs (K=2 MXU pass
    #     would be ~2% utilized) ---
    w1v = w1[...]                                   # (64, 2)
    h = (w1v[:, 0:1] * x[0:1, :]
         + w1v[:, 1:2] * x[1:2, :]
         + b1[...])                                 # (64, tile_n)
    h = jnp.tanh(h)

    # --- block 2: Linear(64,64)+BN+Tanh on the MXU ---
    h = jnp.dot(w2[...], h, preferred_element_type=jnp.float32) + b2[...]
    h = jnp.tanh(h)

    # --- block 3: Linear(64,8)+BN+Tanh on the MXU ---
    h = jnp.dot(w3[...], h, preferred_element_type=jnp.float32) + b3[...]
    h = jnp.tanh(h)                                 # (8, tile_n)

    # --- head: Linear(8,1) as a sublane reduction (XLU) ---
    y = jnp.sum(w4[...] * h, axis=0, keepdims=True) + b4[...]  # (1, tile_n)
    o_ref[...] = y.astype(o_ref.dtype)


def _fold_params(params):
    """Fold BatchNorm (running stats) and Linear bias into weight/bias pairs.

    Returns 8 arrays laid out for the batch-on-lanes kernel:
      (64,2),(64,1), (64,64),(64,1), (8,64),(8,1), (8,1),(1,1)
    """
    (w1, b1, g1, be1, m1, v1,
     w2, b2, g2, be2, m2, v2,
     w3, b3, g3, be3, m3, v3,
     w4, b4) = params

    def fold(w, b, g, be, m, v):
        scale = g * lax.rsqrt(v + BN_EPS)           # (1, d_out)
        wf = (w * scale).T                          # (d_out, d_in)
        bf = ((b - m) * scale + be).T               # (d_out, 1)
        return wf, bf

    w1f, b1f = fold(w1, b1, g1, be1, m1, v1)
    w2f, b2f = fold(w2, b2, g2, be2, m2, v2)
    w3f, b3f = fold(w3, b3, g3, be3, m3, v3)
    return (w1f, b1f, w2f, b2f, w3f, b3f, w4, b4.T)   # w4 kept as (8,1)


@functools.partial(jax.jit, static_argnames=("tile_n",))
def mlp_forward(x, params, *, tile_n=1024):
    """x: (N, 2) float32. params: flat tuple of 20 parameter arrays (2-D)."""
    n, in_dim = x.shape
    assert in_dim == 2

    # Pick an effective tile: big tiles amortize the ~0.35us/step pipeline
    # overhead; small batches collapse to a single 128-aligned tile.
    if n <= tile_n:
        n_pad = _round_up(max(n, 1), 128)
        tile = n_pad
    else:
        assert tile_n % 128 == 0, "tile_n must be a multiple of 128"
        n_pad = _round_up(n, tile_n)
        tile = tile_n

    folded = _fold_params(params)

    # Batch-on-lanes layout: (2, N), padded along the lane/batch axis.
    xT = x.T
    if n_pad != n:
        xT = jnp.pad(xT, ((0, 0), (0, n_pad - n)))

    grid = (n_pad // tile,)

    def full_spec(arr):
        # Whole (tiny) parameter array resident in VMEM, replicated over grid.
        return pl.BlockSpec(arr.shape, lambda i: (0, 0))

    in_specs = [pl.BlockSpec((2, tile), lambda i: (0, i))]
    in_specs += [full_spec(p) for p in folded]
    out_spec = pl.BlockSpec((1, tile), lambda i: (0, i))

    # Advisory cost estimate: this call is tanh/EUP-heavy, not trivially cheap.
    flops = 2 * n_pad * (2 * 64 + 64 * 64 + 64 * 8 + 8 * 1)
    transcendentals = n_pad * (64 + 64 + 8)
    bytes_accessed = 4 * (n_pad * (2 + 1) + sum(int(p.size) for p in folded))
    cost = pl.CostEstimate(flops=flops, transcendentals=transcendentals,
                           bytes_accessed=bytes_accessed)

    out = pl.pallas_call(
        _mlp_kernel,
        out_shape=jax.ShapeDtypeStruct((1, n_pad), jnp.float32),
        grid_spec=pltpu.PrefetchScalarGridSpec(
            num_scalar_prefetch=0,
            grid=grid,
            in_specs=in_specs,
            out_specs=out_spec,
        ),
        compiler_params=pltpu.CompilerParams(
            dimension_semantics=("parallel",)),
        cost_estimate=cost,
    )(xT, *folded)

    return out[:, :n].T  # (N, 1)


def init_params(key):
    """Deterministic parameter init mirroring PyTorch defaults (shapes only).

    Linear: W ~ U(-1/sqrt(fan_in), 1/sqrt(fan_in)), same for bias.
    BatchNorm: gamma=1, beta=0, running stats slightly randomized so BN is a
    non-trivial affine transform. Vectors stored as (1, D) rows.
    """
    dims = [(2, 64), (64, 64), (64, 8), (8, 1)]
    keys = jax.random.split(key, 32)
    ki = iter(range(32))

    def linear(in_d, out_d):
        bound = 1.0 / jnp.sqrt(in_d)
        w = jax.random.uniform(keys[next(ki)], (in_d, out_d),
                               minval=-bound, maxval=bound, dtype=jnp.float32)
        b = jax.random.uniform(keys[next(ki)], (1, out_d),
                               minval=-bound, maxval=bound, dtype=jnp.float32)
        return w, b

    def batchnorm(d):
        gamma = jnp.ones((1, d), jnp.float32)
        beta = jnp.zeros((1, d), jnp.float32)
        rmean = 0.1 * jax.random.normal(keys[next(ki)], (1, d), jnp.float32)
        rvar = 1.0 + 0.1 * jax.random.uniform(keys[next(ki)], (1, d),
                                              dtype=jnp.float32)
        return gamma, beta, rmean, rvar

    w1, b1 = linear(*dims[0]); g1, be1, m1, v1 = batchnorm(64)
    w2, b2 = linear(*dims[1]); g2, be2, m2, v2 = batchnorm(64)
    w3, b3 = linear(*dims[2]); g3, be3, m3, v3 = batchnorm(8)
    w4, b4 = linear(*dims[3])

    return (w1, b1, g1, be1, m1, v1,
            w2, b2, g2, be2, m2, v2,
            w3, b3, g3, be3, m3, v3,
            w4, b4)


def reference_forward(x, params):
    """Pure-JAX reference (un-folded BN) for correctness checking."""
    (w1, b1, g1, be1, m1, v1,
     w2, b2, g2, be2, m2, v2,
     w3, b3, g3, be3, m3, v3,
     w4, b4) = params

    def bn(h, g, be, m, v):
        return (h - m) * lax.rsqrt(v + BN_EPS) * g + be

    h = jnp.tanh(bn(x @ w1 + b1, g1, be1, m1, v1))
    h = jnp.tanh(bn(h @ w2 + b2, g2, be2, m2, v2))
    h = jnp.tanh(bn(h @ w3 + b3, g3, be3, m3, v3))
    return h @ w4 + b4


if __name__ == "__main__":
    key = jax.random.PRNGKey(0)
    pkey, xkey = jax.random.split(key)

    params = init_params(pkey)

    N = 64  # small demo batch; padded to one 128-wide lane tile internally
    x = jax.random.normal(xkey, (N, 2), dtype=jnp.float32)

    out = mlp_forward(x, params)
    out = jax.block_until_ready(out)

    ref = reference_forward(x, params)
    assert out.shape == (N, 1), out.shape
    assert jnp.allclose(out, ref, atol=1e-4, rtol=1e-4), (
        float(jnp.max(jnp.abs(out - ref))))

    print("KERNEL_OK")
</pallas_src>

<mosaic_0001>
module attributes {stable_mosaic.version = 11 : i64} {
  func.func @_mlp_kernel(%arg0: i32, %arg1: memref<2x128xf32, #tpu.memory_space<vmem>>, %arg2: memref<64x2xf32, #tpu.memory_space<vmem>>, %arg3: memref<64x1xf32, #tpu.memory_space<vmem>>, %arg4: memref<64x64xf32, #tpu.memory_space<vmem>>, %arg5: memref<64x1xf32, #tpu.memory_space<vmem>>, %arg6: memref<8x64xf32, #tpu.memory_space<vmem>>, %arg7: memref<8x1xf32, #tpu.memory_space<vmem>>, %arg8: memref<8x1xf32, #tpu.memory_space<vmem>>, %arg9: memref<1x1xf32, #tpu.memory_space<vmem>>, %arg10: memref<1x128xf32, #tpu.memory_space<vmem>>) attributes {dimension_semantics = [#tpu.dimension_semantics<parallel>], iteration_bounds = array<i64: 1>, scalar_prefetch = 0 : i64, scratch_operands = 0 : i64, tpu.core_type = #tpu.core_type<tc>, window_params = [{transform_indices = @transform_0, window_bounds = array<i64: 2, 128>}, {pipeline_mode = #tpu.pipeline_mode<synchronous>, transform_indices = @transform_1, window_bounds = array<i64: 64, 2>}, {pipeline_mode = #tpu.pipeline_mode<synchronous>, transform_indices = @transform_2, window_bounds = array<i64: 64, 1>}, {pipeline_mode = #tpu.pipeline_mode<synchronous>, transform_indices = @transform_3, window_bounds = array<i64: 64, 64>}, {pipeline_mode = #tpu.pipeline_mode<synchronous>, transform_indices = @transform_4, window_bounds = array<i64: 64, 1>}, {pipeline_mode = #tpu.pipeline_mode<synchronous>, transform_indices = @transform_5, window_bounds = array<i64: 8, 64>}, {pipeline_mode = #tpu.pipeline_mode<synchronous>, transform_indices = @transform_6, window_bounds = array<i64: 8, 1>}, {pipeline_mode = #tpu.pipeline_mode<synchronous>, transform_indices = @transform_7, window_bounds = array<i64: 8, 1>}, {pipeline_mode = #tpu.pipeline_mode<synchronous>, transform_indices = @transform_8, window_bounds = array<i64: 1, 1>}, {transform_indices = @transform_9, window_bounds = array<i64: 1, 128>}]} {
    %c0 = arith.constant 0 : index
    %c0_0 = arith.constant 0 : index
    %0 = vector.load %arg1[%c0, %c0_0] : memref<2x128xf32, #tpu.memory_space<vmem>>, vector<2x128xf32>
    %c0_1 = arith.constant 0 : index
    %c0_2 = arith.constant 0 : index
    %1 = vector.load %arg2[%c0_1, %c0_2] : memref<64x2xf32, #tpu.memory_space<vmem>>, vector<64x2xf32>
    %2 = vector.extract_strided_slice %1 {offsets = [0, 0], sizes = [64, 1], strides = [1, 1]} : vector<64x2xf32> to vector<64x1xf32>
    %3 = vector.extract_strided_slice %0 {offsets = [0, 0], sizes = [1, 128], strides = [1, 1]} : vector<2x128xf32> to vector<1x128xf32>
    %4 = vector.broadcast %2 : vector<64x1xf32> to vector<64x128xf32>
    %5 = vector.broadcast %3 : vector<1x128xf32> to vector<64x128xf32>
    %6 = arith.mulf %4, %5 : vector<64x128xf32>
    %7 = vector.extract_strided_slice %1 {offsets = [0, 1], sizes = [64, 1], strides = [1, 1]} : vector<64x2xf32> to vector<64x1xf32>
    %8 = vector.extract_strided_slice %0 {offsets = [1, 0], sizes = [1, 128], strides = [1, 1]} : vector<2x128xf32> to vector<1x128xf32>
    %9 = vector.broadcast %7 : vector<64x1xf32> to vector<64x128xf32>
    %10 = vector.broadcast %8 : vector<1x128xf32> to vector<64x128xf32>
    %11 = arith.mulf %9, %10 : vector<64x128xf32>
    %12 = arith.addf %6, %11 : vector<64x128xf32>
    %c0_3 = arith.constant 0 : index
    %c0_4 = arith.constant 0 : index
    %13 = vector.load %arg3[%c0_3, %c0_4] : memref<64x1xf32, #tpu.memory_space<vmem>>, vector<64x1xf32>
    %14 = vector.broadcast %13 : vector<64x1xf32> to vector<64x128xf32>
    %15 = arith.addf %12, %14 : vector<64x128xf32>
    %16 = math.tanh %15 : vector<64x128xf32>
    %c0_5 = arith.constant 0 : index
    %c0_6 = arith.constant 0 : index
    %17 = vector.load %arg4[%c0_5, %c0_6] : memref<64x64xf32, #tpu.memory_space<vmem>>, vector<64x64xf32>
    %cst = arith.constant dense<0.000000e+00> : vector<64x128xf32>
    %18 = tpu.matmul %17, %16, %cst {dimension_numbers = #tpu.dot_dimension_numbers<[1], [0], [0], [1], [0, 0, 1, 1], [], []>} : vector<64x64xf32>, vector<64x128xf32>, vector<64x128xf32> -> vector<64x128xf32>
    %c0_7 = arith.constant 0 : index
    %c0_8 = arith.constant 0 : index
    %19 = vector.load %arg5[%c0_7, %c0_8] : memref<64x1xf32, #tpu.memory_space<vmem>>, vector<64x1xf32>
    %20 = vector.broadcast %19 : vector<64x1xf32> to vector<64x128xf32>
    %21 = arith.addf %18, %20 : vector<64x128xf32>
    %22 = math.tanh %21 : vector<64x128xf32>
    %c0_9 = arith.constant 0 : index
    %c0_10 = arith.constant 0 : index
    %23 = vector.load %arg6[%c0_9, %c0_10] : memref<8x64xf32, #tpu.memory_space<vmem>>, vector<8x64xf32>
    %cst_11 = arith.constant dense<0.000000e+00> : vector<8x128xf32>
    %24 = tpu.matmul %23, %22, %cst_11 {dimension_numbers = #tpu.dot_dimension_numbers<[1], [0], [0], [1], [0, 0, 1, 1], [], []>} : vector<8x64xf32>, vector<64x128xf32>, vector<8x128xf32> -> vector<8x128xf32>
    %c0_12 = arith.constant 0 : index
    %c0_13 = arith.constant 0 : index
    %25 = vector.load %arg7[%c0_12, %c0_13] : memref<8x1xf32, #tpu.memory_space<vmem>>, vector<8x1xf32>
    %26 = vector.broadcast %25 : vector<8x1xf32> to vector<8x128xf32>
    %27 = arith.addf %24, %26 : vector<8x128xf32>
    %28 = math.tanh %27 : vector<8x128xf32>
    %c0_14 = arith.constant 0 : index
    %c0_15 = arith.constant 0 : index
    %29 = vector.load %arg8[%c0_14, %c0_15] : memref<8x1xf32, #tpu.memory_space<vmem>>, vector<8x1xf32>
    %30 = vector.broadcast %29 : vector<8x1xf32> to vector<8x128xf32>
    %31 = arith.mulf %30, %28 : vector<8x128xf32>
    %cst_16 = arith.constant dense<0.000000e+00> : vector<128xf32>
    %32 = vector.multi_reduction <add>, %31, %cst_16 [0] : vector<8x128xf32> to vector<128xf32>
    %33 = vector.shape_cast %32 : vector<128xf32> to vector<1x128xf32>
    %c0_17 = arith.constant 0 : index
    %c0_18 = arith.constant 0 : index
    %34 = vector.load %arg9[%c0_17, %c0_18] : memref<1x1xf32, #tpu.memory_space<vmem>>, vector<1x1xf32>
    %35 = vector.broadcast %34 : vector<1x1xf32> to vector<1x128xf32>
    %36 = arith.addf %33, %35 : vector<1x128xf32>
    %c0_19 = arith.constant 0 : index
    %c0_20 = arith.constant 0 : index
    %37 = vector.load %arg10[%c0_19, %c0_20] : memref<1x128xf32, #tpu.memory_space<vmem>>, vector<1x128xf32>
    tpu.vector_store %arg10[%c0_19, %c0_20], %36 {strides = array<i32>} : memref<1x128xf32, #tpu.memory_space<vmem>>, vector<1x128xf32>,
    return
  }
  func.func @transform_0(%arg0: i32) -> (i32, i32) {
    %c0_i32 = arith.constant 0 : i32
    %c0_i32_0 = arith.constant 0 : i32
    return %c0_i32, %arg0 : i32, i32
  }
  func.func @transform_1(%arg0: i32) -> (i32, i32) {
    %c0_i32 = arith.constant 0 : i32
    %c0_i32_0 = arith.constant 0 : i32
    %c0_i32_1 = arith.constant 0 : i32
    return %c0_i32, %c0_i32_0 : i32, i32
  }
  func.func @transform_2(%arg0: i32) -> (i32, i32) {
    %c0_i32 = arith.constant 0 : i32
    %c0_i32_0 = arith.constant 0 : i32
    %c0_i32_1 = arith.constant 0 : i32
    return %c0_i32, %c0_i32_0 : i32, i32
  }
  func.func @transform_3(%arg0: i32) -> (i32, i32) {
    %c0_i32 = arith.constant 0 : i32
    %c0_i32_0 = arith.constant 0 : i32
    %c0_i32_1 = arith.constant 0 : i32
    return %c0_i32, %c0_i32_0 : i32, i32
  }
  func.func @transform_4(%arg0: i32) -> (i32, i32) {
    %c0_i32 = arith.constant 0 : i32
    %c0_i32_0 = arith.constant 0 : i32
    %c0_i32_1 = arith.constant 0 : i32
    return %c0_i32, %c0_i32_0 : i32, i32
  }
  func.func @transform_5(%arg0: i32) -> (i32, i32) {
    %c0_i32 = arith.constant 0 : i32
    %c0_i32_0 = arith.constant 0 : i32
    %c0_i32_1 = arith.constant 0 : i32
    return %c0_i32, %c0_i32_0 : i32, i32
  }
  func.func @transform_6(%arg0: i32) -> (i32, i32) {
    %c0_i32 = arith.constant 0 : i32
    %c0_i32_0 = arith.constant 0 : i32
    %c0_i32_1 = arith.constant 0 : i32
    return %c0_i32, %c0_i32_0 : i32, i32
  }
  func.func @transform_7(%arg0: i32) -> (i32, i32) {
    %c0_i32 = arith.constant 0 : i32
    %c0_i32_0 = arith.constant 0 : i32
    %c0_i32_1 = arith.constant 0 : i32
    return %c0_i32, %c0_i32_0 : i32, i32
  }
  func.func @transform_8(%arg0: i32) -> (i32, i32) {
    %c0_i32 = arith.constant 0 : i32
    %c0_i32_0 = arith.constant 0 : i32
    %c0_i32_1 = arith.constant 0 : i32
    return %c0_i32, %c0_i32_0 : i32, i32
  }
  func.func @transform_9(%arg0: i32) -> (i32, i32) {
    %c0_i32 = arith.constant 0 : i32
    %c0_i32_0 = arith.constant 0 : i32
    return %c0_i32, %arg0 : i32, i32
  }
}

</mosaic_0001>

<llo_original>
// kernel: mlp_forward.1
$region0: #{mlp_forward.1}
  #allocation0 [shape = 'u32[]', space=smem, size = 0x4, offset = 0x4, fixed_abs, tag = 'smem constant byte address 0x4 - core index']
  #allocation1 [shape = 'u32[144,128]{1,0:T(1,128)}', space=vmem, size = 0x12000, scoped, tag = 'internal scratch']
  #allocation2 [shape = 'f32[1,1]{1,0:T(1,128)S(1)}', space=vmem, size = 0x200, scoped, tag = 'scoped memory for mlp_forward.1']
  %s0 = inlined_call_operand.vmem [shape: f32[2,128], index: 0, kind: input, shape index: {}]
  %s1 = inlined_call_operand.vmem [shape: f32[64,2], index: 1, kind: input, shape index: {}]
  %s2 = inlined_call_operand.vmem [shape: f32[64,1], index: 2, kind: input, shape index: {}]
  %s3 = inlined_call_operand.vmem [shape: f32[64,64], index: 3, kind: input, shape index: {}]
  %s4 = inlined_call_operand.vmem [shape: f32[64,1], index: 4, kind: input, shape index: {}]
  %s5 = inlined_call_operand.vmem [shape: f32[8,64], index: 5, kind: input, shape index: {}]
  %s6 = inlined_call_operand.vmem [shape: f32[8,1], index: 6, kind: input, shape index: {}]
  %s7 = inlined_call_operand.vmem [shape: f32[8,1], index: 7, kind: input, shape index: {}]
  %s8 = inlined_call_operand.<no memory space> [shape: f32[1,1], index: 8, kind: input, shape index: {}]
  %s9 = inlined_call_operand.vmem [shape: f32[1,128], index: 9, kind: output, shape index: {}]
  %s10 = sld [smem:[#allocation0]]
  $region46: #{mlp_forward.1} parent=0
    _
  %s12 = ssub.s32 1, %s10
  %s13 = scalar_select 0, %s12, %s10
  %v14 = vstv %s8
  %15 = vst [vmem:[#allocation2] sm:$0x1] %v14
  // Predicated region
  $region2: #{mlp_forward.1} parent=0 // pred_check
    _
  $region3: #{mlp_forward.1} parent=0 // pred_check_branch
    %17 = sbr.rel (0) target = $region5
  $region4: #{mlp_forward.1} parent=0 // pred_region
    _
  $region5: #{mlp_forward.1} parent=0 // pred_fallthru
    _
  // Predicated region
  $region6: #{mlp_forward.1} parent=0 // pred_check
    _
  $region7: #{mlp_forward.1} parent=0 // pred_check_branch
    %19 = sbr.rel (0) target = $region9
  $region8: #{mlp_forward.1} parent=0 // pred_region
    _
  $region9: #{mlp_forward.1} parent=0 // pred_fallthru
    _
  // Predicated region
  $region10: #{mlp_forward.1} parent=0 // pred_check
    _
  $region11: #{mlp_forward.1} parent=0 // pred_check_branch
    %21 = sbr.rel (0) target = $region13
  $region12: #{mlp_forward.1} parent=0 // pred_region
    _
  $region13: #{mlp_forward.1} parent=0 // pred_fallthru
    _
  // Predicated region
  $region14: #{mlp_forward.1} parent=0 // pred_check
    _
  $region15: #{mlp_forward.1} parent=0 // pred_check_branch
    %23 = sbr.rel (0) target = $region17
  $region16: #{mlp_forward.1} parent=0 // pred_region
    _
  $region17: #{mlp_forward.1} parent=0 // pred_fallthru
    _
  // Predicated region
  $region18: #{mlp_forward.1} parent=0 // pred_check
    _
  $region19: #{mlp_forward.1} parent=0 // pred_check_branch
    %25 = sbr.rel (0) target = $region21
  $region20: #{mlp_forward.1} parent=0 // pred_region
    _
  $region21: #{mlp_forward.1} parent=0 // pred_fallthru
    _
  // Predicated region
  $region22: #{mlp_forward.1} parent=0 // pred_check
    _
  $region23: #{mlp_forward.1} parent=0 // pred_check_branch
    %27 = sbr.rel (0) target = $region25
  $region24: #{mlp_forward.1} parent=0 // pred_region
    _
  $region25: #{mlp_forward.1} parent=0 // pred_fallthru
    _
  // Predicated region
  $region26: #{mlp_forward.1} parent=0 // pred_check
    _
  $region27: #{mlp_forward.1} parent=0 // pred_check_branch
    %29 = sbr.rel (0) target = $region29
  $region28: #{mlp_forward.1} parent=0 // pred_region
    _
  $region29: #{mlp_forward.1} parent=0 // pred_fallthru
    _
  // Predicated region
  $region30: #{mlp_forward.1} parent=0 // pred_check
    _
  $region31: #{mlp_forward.1} parent=0 // pred_check_branch
    %31 = sbr.rel (0) target = $region33
  $region32: #{mlp_forward.1} parent=0 // pred_region
    _
  $region33: #{mlp_forward.1} parent=0 // pred_fallthru
    _
  // Predicated region
  $region34: #{mlp_forward.1} parent=0 // pred_check
    _
  $region35: #{mlp_forward.1} parent=0 // pred_check_branch
    %33 = sbr.rel (0) target = $region37
  $region36: #{mlp_forward.1} parent=0 // pred_region
    _
  $region37: #{mlp_forward.1} parent=0 // pred_fallthru
    _
  %v34 = vld [vmem:[%s0] sm:$0x3]
  %v35 = vld [vmem:[%s1] sm:$0xff]
  %v36 = vld [vmem:[%s1 + $0x8] sm:$0xff]
  %v37 = vld [vmem:[%s1 + $0x10] sm:$0xff]
  %v38 = vld [vmem:[%s1 + $0x18] sm:$0xff]
  %v39 = vld [vmem:[%s1 + $0x20] sm:$0xff]
  %v40 = vld [vmem:[%s1 + $0x28] sm:$0xff]
  %v41 = vld [vmem:[%s1 + $0x30] sm:$0xff]
  %v42 = vld [vmem:[%s1 + $0x38] sm:$0xff]
  %44 = vset.pattern.permute.xlu0 0
  %45 = vperm.xlu0 %44, %v35
  %v46 = vpop.permute.xlu0 %45
  %49 = vset.pattern.permute.xlu0 0
  %50 = vperm.xlu0 %49, %v36
  %v51 = vpop.permute.xlu0 %50
  %54 = vset.pattern.permute.xlu0 0
  %55 = vperm.xlu0 %54, %v37
  %v56 = vpop.permute.xlu0 %55
  %59 = vset.pattern.permute.xlu0 0
  %60 = vperm.xlu0 %59, %v38
  %v61 = vpop.permute.xlu0 %60
  %64 = vset.pattern.permute.xlu0 0
  %65 = vperm.xlu0 %64, %v39
  %v66 = vpop.permute.xlu0 %65
  %69 = vset.pattern.permute.xlu0 0
  %70 = vperm.xlu0 %69, %v40
  %v71 = vpop.permute.xlu0 %70
  %74 = vset.pattern.permute.xlu0 0
  %75 = vperm.xlu0 %74, %v41
  %v76 = vpop.permute.xlu0 %75
  %79 = vset.pattern.permute.xlu0 0
  %80 = vperm.xlu0 %79, %v42
  %v81 = vpop.permute.xlu0 %80
  %v83 = vlaneseq
  %v84 = vshrl.u32 %v83, 7
  %v85 = vsub.s32 0, %v84
  %v86 = vrot.slane %v34, %v85
  %v87 = vmul.f32 %v46, %v86
  %v88 = vmul.f32 %v51, %v86
  %v89 = vmul.f32 %v56, %v86
  %v90 = vmul.f32 %v61, %v86
  %v91 = vmul.f32 %v66, %v86
  %v92 = vmul.f32 %v71, %v86
  %v93 = vmul.f32 %v76, %v86
  %v94 = vmul.f32 %v81, %v86
  %95 = vset.pattern.permute.xlu0 1
  %96 = vperm.xlu0 %95, %v35
  %v97 = vpop.permute.xlu0 %96
  %99 = vset.pattern.permute.xlu0 1
  %100 = vperm.xlu0 %99, %v36
  %v101 = vpop.permute.xlu0 %100
  %103 = vset.pattern.permute.xlu0 1
  %104 = vperm.xlu0 %103, %v37
  %v105 = vpop.permute.xlu0 %104
  %107 = vset.pattern.permute.xlu0 1
  %108 = vperm.xlu0 %107, %v38
  %v109 = vpop.permute.xlu0 %108
  %111 = vset.pattern.permute.xlu0 1
  %112 = vperm.xlu0 %111, %v39
  %v113 = vpop.permute.xlu0 %112
  %115 = vset.pattern.permute.xlu0 1
  %116 = vperm.xlu0 %115, %v40
  %v117 = vpop.permute.xlu0 %116
  %119 = vset.pattern.permute.xlu0 1
  %120 = vperm.xlu0 %119, %v41
  %v121 = vpop.permute.xlu0 %120
  %123 = vset.pattern.permute.xlu0 1
  %124 = vperm.xlu0 %123, %v42
  %v125 = vpop.permute.xlu0 %124
  %v127 = vlaneseq
  %v128 = vshrl.u32 %v127, 7
  %v129 = vsub.s32 1, %v128
  %v130 = vrot.slane %v34, %v129
  %v131 = vmul.f32 %v97, %v130
  %v132 = vmul.f32 %v101, %v130
  %v133 = vmul.f32 %v105, %v130
  %v134 = vmul.f32 %v109, %v130
  %v135 = vmul.f32 %v113, %v130
  %v136 = vmul.f32 %v117, %v130
  %v137 = vmul.f32 %v121, %v130
  %v138 = vmul.f32 %v125, %v130
  %v139 = vadd.f32 %v87, %v131
  %v140 = vadd.f32 %v88, %v132
  %v141 = vadd.f32 %v89, %v133
  %v142 = vadd.f32 %v90, %v134
  %v143 = vadd.f32 %v91, %v135
  %v144 = vadd.f32 %v92, %v136
  %v145 = vadd.f32 %v93, %v137
  %v146 = vadd.f32 %v94, %v138
  %v147 = vld [vmem:[%s2] sm:$0xff]
  %v148 = vld [vmem:[%s2 + $0x8] sm:$0xff]
  %v149 = vld [vmem:[%s2 + $0x10] sm:$0xff]
  %v150 = vld [vmem:[%s2 + $0x18] sm:$0xff]
  %v151 = vld [vmem:[%s2 + $0x20] sm:$0xff]
  %v152 = vld [vmem:[%s2 + $0x28] sm:$0xff]
  %v153 = vld [vmem:[%s2 + $0x30] sm:$0xff]
  %v154 = vld [vmem:[%s2 + $0x38] sm:$0xff]
  %156 = vset.pattern.permute.xlu0 0
  %157 = vperm.xlu0 %156, %v147
  %v158 = vpop.permute.xlu0 %157
  %161 = vset.pattern.permute.xlu0 0
  %162 = vperm.xlu0 %161, %v148
  %v163 = vpop.permute.xlu0 %162
  %166 = vset.pattern.permute.xlu0 0
  %167 = vperm.xlu0 %166, %v149
  %v168 = vpop.permute.xlu0 %167
  %171 = vset.pattern.permute.xlu0 0
  %172 = vperm.xlu0 %171, %v150
  %v173 = vpop.permute.xlu0 %172
  %176 = vset.pattern.permute.xlu0 0
  %177 = vperm.xlu0 %176, %v151
  %v178 = vpop.permute.xlu0 %177
  %181 = vset.pattern.permute.xlu0 0
  %182 = vperm.xlu0 %181, %v152
  %v183 = vpop.permute.xlu0 %182
  %186 = vset.pattern.permute.xlu0 0
  %187 = vperm.xlu0 %186, %v153
  %v188 = vpop.permute.xlu0 %187
  %191 = vset.pattern.permute.xlu0 0
  %192 = vperm.xlu0 %191, %v154
  %v193 = vpop.permute.xlu0 %192
  %v195 = vadd.f32 %v139, %v158
  %v196 = vadd.f32 %v140, %v163
  %v197 = vadd.f32 %v141, %v168
  %v198 = vadd.f32 %v142, %v173
  %v199 = vadd.f32 %v143, %v178
  %v200 = vadd.f32 %v144, %v183
  %v201 = vadd.f32 %v145, %v188
  %v202 = vadd.f32 %v146, %v193
  %v203 = vtanh.pop %v195
  %v204 = vtanh.pop %v196
  %v205 = vtanh.pop %v197
  %v206 = vtanh.pop %v198
  %v207 = vtanh.pop %v199
  %v208 = vtanh.pop %v200
  %v209 = vtanh.pop %v201
  %v210 = vtanh.pop %v202
  %v211 = vld [vmem:[%s3] sm:$0xff]
  %v212 = vld [vmem:[%s3 + $0x8] sm:$0xff]
  %v213 = vld [vmem:[%s3 + $0x10] sm:$0xff]
  %v214 = vld [vmem:[%s3 + $0x18] sm:$0xff]
  %v215 = vld [vmem:[%s3 + $0x20] sm:$0xff]
  %v216 = vld [vmem:[%s3 + $0x28] sm:$0xff]
  %v217 = vld [vmem:[%s3 + $0x30] sm:$0xff]
  %v218 = vld [vmem:[%s3 + $0x38] sm:$0xff]
  %v219 = vld [vmem:[%s4] sm:$0xff]
  %v220 = vld [vmem:[%s4 + $0x8] sm:$0xff]
  %v221 = vld [vmem:[%s4 + $0x10] sm:$0xff]
  %v222 = vld [vmem:[%s4 + $0x18] sm:$0xff]
  %v223 = vld [vmem:[%s4 + $0x20] sm:$0xff]
  %v224 = vld [vmem:[%s4 + $0x28] sm:$0xff]
  %v225 = vld [vmem:[%s4 + $0x30] sm:$0xff]
  %v226 = vld [vmem:[%s4 + $0x38] sm:$0xff]
  %228 = vset.pattern.permute.xlu0 0
  %229 = vperm.xlu0 %228, %v219
  %v230 = vpop.permute.xlu0 %229
  %233 = vset.pattern.permute.xlu0 0
  %234 = vperm.xlu0 %233, %v220
  %v235 = vpop.permute.xlu0 %234
  %238 = vset.pattern.permute.xlu0 0
  %239 = vperm.xlu0 %238, %v221
  %v240 = vpop.permute.xlu0 %239
  %243 = vset.pattern.permute.xlu0 0
  %244 = vperm.xlu0 %243, %v222
  %v245 = vpop.permute.xlu0 %244
  %248 = vset.pattern.permute.xlu0 0
  %249 = vperm.xlu0 %248, %v223
  %v250 = vpop.permute.xlu0 %249
  %253 = vset.pattern.permute.xlu0 0
  %254 = vperm.xlu0 %253, %v224
  %v255 = vpop.permute.xlu0 %254
  %258 = vset.pattern.permute.xlu0 0
  %259 = vperm.xlu0 %258, %v225
  %v260 = vpop.permute.xlu0 %259
  %263 = vset.pattern.permute.xlu0 0
  %264 = vperm.xlu0 %263, %v226
  %v265 = vpop.permute.xlu0 %264
  %vm267 = vcmask 523264
  %v269 = vsel %vm267, %v211, 0
  %v272 = vsel %vm267, %v212, 0
  %v275 = vsel %vm267, %v213, 0
  %v278 = vsel %vm267, %v214, 0
  %v281 = vsel %vm267, %v215, 0
  %v284 = vsel %vm267, %v216, 0
  %v287 = vsel %vm267, %v217, 0
  %v290 = vsel %vm267, %v218, 0
  %292 = vmatprep.subr.mxu0 0.0
  %293 = vmatpush1.msra.mxu0 %v203
  %294 = vmatprep.subr.mxu0 0.0
  %295 = vmatpush1.msra.mxu0 %v204
  %296 = vmatprep.subr.mxu0 0.0
  %297 = vmatpush1.msra.mxu0 %v205
  %298 = vmatprep.subr.mxu0 0.0
  %299 = vmatpush1.msra.mxu0 %v206
  %300 = vmatprep.subr.mxu0 0.0
  %301 = vmatpush1.msra.mxu0 %v207
  %302 = vmatprep.subr.mxu0 0.0
  %303 = vmatpush1.msra.mxu0 %v208
  %304 = vmatprep.subr.mxu0 0.0
  %305 = vmatpush1.msra.mxu0 %v209
  %306 = vmatprep.subr.mxu0 0.0
  %307 = vmatpush1.msra.mxu0 %v210
  %308 = vmatprep.subr.mxu0 0.0
  %309 = vmatpush1.msra.mxu0 0.0
  %310 = vmatprep.subr.mxu0 0.0
  %311 = vmatpush1.msra.mxu0 0.0
  %312 = vmatprep.subr.mxu0 0.0
  %313 = vmatpush1.msra.mxu0 0.0
  %314 = vmatprep.subr.mxu0 0.0
  %315 = vmatpush1.msra.mxu0 0.0
  %316 = vmatprep.subr.mxu0 0.0
  %317 = vmatpush1.msra.mxu0 0.0
  %318 = vmatprep.subr.mxu0 0.0
  %319 = vmatpush1.msra.mxu0 0.0
  %320 = vmatprep.subr.mxu0 0.0
  %321 = vmatpush1.msra.mxu0 0.0
  %322 = vmatprep.subr.mxu0 0.0
  %323 = vmatpush1.msra.mxu0 0.0
  %324 = vmatprep.subr.mxu0 0.0
  %325 = vmatpush1.msra.mxu0 0.0
  %326 = vmatprep.subr.mxu0 0.0
  %327 = vmatpush1.msra.mxu0 0.0
  %328 = vmatprep.subr.mxu0 0.0
  %329 = vmatpush1.msra.mxu0 0.0
  %330 = vmatprep.subr.mxu0 0.0
  %331 = vmatpush1.msra.mxu0 0.0
  %332 = vmatprep.subr.mxu0 0.0
  %333 = vmatpush1.msra.mxu0 0.0
  %334 = vmatprep.subr.mxu0 0.0
  %335 = vmatpush1.msra.mxu0 0.0
  %336 = vmatprep.subr.mxu0 0.0
  %337 = vmatpush1.msra.mxu0 0.0
  %338 = vmatprep.subr.mxu0 0.0
  %339 = vmatpush1.msra.mxu0 0.0
  %340 = vmatprep.subr.mxu0 0.0
  %341 = vmatpush1.msra.mxu0 0.0
  %342 = vmatprep.subr.mxu0 0.0
  %343 = vmatpush1.msra.mxu0 0.0
  %344 = vmatprep.subr.mxu0 0.0
  %345 = vmatpush1.msra.mxu0 0.0
  %346 = vmatprep.subr.mxu0 0.0
  %347 = vmatpush1.msra.mxu0 0.0
  %348 = vmatprep.subr.mxu0 0.0
  %349 = vmatpush1.msra.mxu0 0.0
  %350 = vmatprep.subr.mxu0 0.0
  %351 = vmatpush1.msra.mxu0 0.0
  %352 = vmatprep.subr.mxu0 0.0
  %353 = vmatpush1.msra.mxu0 0.0
  %354 = vmatprep.subr.mxu0 0.0
  %355 = vmatpush1.msra.mxu0 0.0
  %356 = vmatprep.mubr.f32.mxu0 0.0
  %357 = vmatmul.mubr.f32.gmra.mrb[0].mxu0 %v269
  %v358 = vpop.f32.mrb[0].mxu0
  %v359 = vadd.f32 %v230, %v358
  %v360 = vpop.f32.mrb[0].mxu0
  %361 = vmatprep.mubr.f32.mxu0 0.0
  %362 = vmatmul.mubr.f32.gmra.mrb[0].mxu0 %v272
  %v363 = vpop.f32.mrb[0].mxu0
  %v364 = vadd.f32 %v235, %v363
  %v365 = vpop.f32.mrb[0].mxu0
  %366 = vmatprep.mubr.f32.mxu0 0.0
  %367 = vmatmul.mubr.f32.gmra.mrb[0].mxu0 %v275
  %v368 = vpop.f32.mrb[0].mxu0
  %v369 = vadd.f32 %v240, %v368
  %v370 = vpop.f32.mrb[0].mxu0
  %371 = vmatprep.mubr.f32.mxu0 0.0
  %372 = vmatmul.mubr.f32.gmra.mrb[0].mxu0 %v278
  %v373 = vpop.f32.mrb[0].mxu0
  %v374 = vadd.f32 %v245, %v373
  %v375 = vpop.f32.mrb[0].mxu0
  %376 = vmatprep.mubr.f32.mxu0 0.0
  %377 = vmatmul.mubr.f32.gmra.mrb[0].mxu0 %v281
  %v378 = vpop.f32.mrb[0].mxu0
  %v379 = vadd.f32 %v250, %v378
  %v380 = vpop.f32.mrb[0].mxu0
  %381 = vmatprep.mubr.f32.mxu0 0.0
  %382 = vmatmul.mubr.f32.gmra.mrb[0].mxu0 %v284
  %v383 = vpop.f32.mrb[0].mxu0
  %v384 = vadd.f32 %v255, %v383
  %v385 = vpop.f32.mrb[0].mxu0
  %386 = vmatprep.mubr.f32.mxu0 0.0
  %387 = vmatmul.mubr.f32.gmra.mrb[0].mxu0 %v287
  %v388 = vpop.f32.mrb[0].mxu0
  %v389 = vadd.f32 %v260, %v388
  %v390 = vpop.f32.mrb[0].mxu0
  %391 = vmatprep.mubr.f32.mxu0 0.0
  %392 = vmatmul.mubr.f32.gmra.mrb[0].mxu0 %v290
  %v393 = vpop.f32.mrb[0].mxu0
  %v394 = vadd.f32 %v265, %v393
  %v395 = vpop.f32.mrb[0].mxu0
  %396 = vdwg.mxu0
  %v397 = vtanh.pop %v359
  %v398 = vtanh.pop %v364
  %v399 = vtanh.pop %v369
  %v400 = vtanh.pop %v374
  %v401 = vtanh.pop %v379
  %v402 = vtanh.pop %v384
  %v403 = vtanh.pop %v389
  %v404 = vtanh.pop %v394
  %v405 = vld [vmem:[%s5] sm:$0xff]
  %v406 = vld [vmem:[%s6] sm:$0xff]
  %408 = vset.pattern.permute.xlu0 0
  %409 = vperm.xlu0 %408, %v406
  %v410 = vpop.permute.xlu0 %409
  %v413 = vsel %vm267, %v405, 0
  %415 = vmatprep.subr.mxu0 0.0
  %416 = vmatpush1.msra.mxu0 %v397
  %417 = vmatprep.subr.mxu0 0.0
  %418 = vmatpush1.msra.mxu0 %v398
  %419 = vmatprep.subr.mxu0 0.0
  %420 = vmatpush1.msra.mxu0 %v399
  %421 = vmatprep.subr.mxu0 0.0
  %422 = vmatpush1.msra.mxu0 %v400
  %423 = vmatprep.subr.mxu0 0.0
  %424 = vmatpush1.msra.mxu0 %v401
  %425 = vmatprep.subr.mxu0 0.0
  %426 = vmatpush1.msra.mxu0 %v402
  %427 = vmatprep.subr.mxu0 0.0
  %428 = vmatpush1.msra.mxu0 %v403
  %429 = vmatprep.subr.mxu0 0.0
  %430 = vmatpush1.msra.mxu0 %v404
  %431 = vmatprep.subr.mxu0 0.0
  %432 = vmatpush1.msra.mxu0 0.0
  %433 = vmatprep.subr.mxu0 0.0
  %434 = vmatpush1.msra.mxu0 0.0
  %435 = vmatprep.subr.mxu0 0.0
  %436 = vmatpush1.msra.mxu0 0.0
  %437 = vmatprep.subr.mxu0 0.0
  %438 = vmatpush1.msra.mxu0 0.0
  %439 = vmatprep.subr.mxu0 0.0
  %440 = vmatpush1.msra.mxu0 0.0
  %441 = vmatprep.subr.mxu0 0.0
  %442 = vmatpush1.msra.mxu0 0.0
  %443 = vmatprep.subr.mxu0 0.0
  %444 = vmatpush1.msra.mxu0 0.0
  %445 = vmatprep.subr.mxu0 0.0
  %446 = vmatpush1.msra.mxu0 0.0
  %447 = vmatprep.subr.mxu0 0.0
  %448 = vmatpush1.msra.mxu0 0.0
  %449 = vmatprep.subr.mxu0 0.0
  %450 = vmatpush1.msra.mxu0 0.0
  %451 = vmatprep.subr.mxu0 0.0
  %452 = vmatpush1.msra.mxu0 0.0
  %453 = vmatprep.subr.mxu0 0.0
  %454 = vmatpush1.msra.mxu0 0.0
  %455 = vmatprep.subr.mxu0 0.0
  %456 = vmatpush1.msra.mxu0 0.0
  %457 = vmatprep.subr.mxu0 0.0
  %458 = vmatpush1.msra.mxu0 0.0
  %459 = vmatprep.subr.mxu0 0.0
  %460 = vmatpush1.msra.mxu0 0.0
  %461 = vmatprep.subr.mxu0 0.0
  %462 = vmatpush1.msra.mxu0 0.0
  %463 = vmatprep.subr.mxu0 0.0
  %464 = vmatpush1.msra.mxu0 0.0
  %465 = vmatprep.subr.mxu0 0.0
  %466 = vmatpush1.msra.mxu0 0.0
  %467 = vmatprep.subr.mxu0 0.0
  %468 = vmatpush1.msra.mxu0 0.0
  %469 = vmatprep.subr.mxu0 0.0
  %470 = vmatpush1.msra.mxu0 0.0
  %471 = vmatprep.subr.mxu0 0.0
  %472 = vmatpush1.msra.mxu0 0.0
  %473 = vmatprep.subr.mxu0 0.0
  %474 = vmatpush1.msra.mxu0 0.0
  %475 = vmatprep.subr.mxu0 0.0
  %476 = vmatpush1.msra.mxu0 0.0
  %477 = vmatprep.subr.mxu0 0.0
  %478 = vmatpush1.msra.mxu0 0.0
  %479 = vmatprep.mubr.f32.mxu0 0.0
  %480 = vmatmul.mubr.f32.gmra.mrb[0].mxu0 %v413
  %v481 = vpop.f32.mrb[0].mxu0
  %v482 = vadd.f32 %v410, %v481
  %v483 = vpop.f32.mrb[0].mxu0
  %484 = vdwg.mxu0
  %v485 = vtanh.pop %v482
  %v486 = vld [vmem:[%s7] sm:$0xff]
  %488 = vset.pattern.permute.xlu0 0
  %489 = vperm.xlu0 %488, %v486
  %v490 = vpop.permute.xlu0 %489
  %v492 = vmul.f32 %v490, %v485
  %v493 = vrot.slane %v492, 4
  %v494 = vadd.f32 %v492, %v493
  %v495 = vrot.slane %v494, 2
  %v496 = vadd.f32 %v494, %v495
  %v497 = vrot.slane %v496, 1
  %v498 = vadd.f32 %v496, %v497
  %v499 = vld [vmem:[#allocation2] sm:$0x1]
  %501 = vset.pattern.permute.xlu0 0
  %502 = vperm.xlu0 %501, %v499
  %v503 = vpop.permute.xlu0 %502
  %v505 = vlaneseq
  %v506 = vshrl.u32 %v505, 7
  %v507 = vsub.s32 0, %v506
  %v508 = vrot.slane %v503, %v507
  %v509 = vadd.f32 %v498, %v508
  %510 = vst [vmem:[%s9] sm:$0x1] %v509
  // Predicated region
  $region38: #{mlp_forward.1} parent=0 // pred_check
    _
  $region39: #{mlp_forward.1} parent=0 // pred_check_branch
    %512 = sbr.rel (0) target = $region41
  $region40: #{mlp_forward.1} parent=0 // pred_region
    _
  $region41: #{mlp_forward.1} parent=0 // pred_fallthru
    _
  // Predicated region
  $region42: #{mlp_forward.1} parent=0 // pred_check
    _
  $region43: #{mlp_forward.1} parent=0 // pred_check_branch
    %514 = sbr.rel (0) target = $region45
  $region44: #{mlp_forward.1} parent=0 // pred_region
    _
  $region45: #{mlp_forward.1} parent=0 // pred_fallthru
    _

</llo_original>
